<compile_context>
chip_gen: v5e
topology: v5e:2x2
jax: 0.10.0
libtpu: 0.0.40
codegen_flags: <defaults>
</compile_context>

<pallas_src>
import jax
import jax.numpy as jnp
import numpy as np
from jax import lax
from jax.scipy.ndimage import map_coordinates
from jax.experimental import pallas as pl
from jax.experimental.pallas import tpu as pltpu


# ----------------------------- small helpers --------------------------------

def _round_up(n, m):
    return ((n + m - 1) // m) * m


def _spatial_tiling(HW, target=512):
    """Pick a lane-aligned spatial tile `t` and padded extent HWp with t | HWp.

    Never collapses to a whole-HW block; padding waste is capped at ~12.5%
    (except when only the minimal 128 tile is possible)."""
    if HW <= target:
        hwp = _round_up(HW, 128)
        return hwp, hwp
    tile = target
    while tile > 128 and (_round_up(HW, tile) - HW) * 8 > HW:
        tile -= 128
    return _round_up(HW, tile), tile


def _pick_k_tile(cin, target=1024):
    """Cin reduction tile: full Cin if small, else the largest 128-multiple
    divisor <= target (fallback: full Cin -> single K step)."""
    if cin <= target:
        return cin
    for d in range(target - (target % 128), 127, -128):
        if cin % d == 0:
            return d
    return cin


def _vmem_limit_bytes():
    """Generation-aware scoped-VMEM budget: ~75% of physical VMEM."""
    cap = 64 * 2**20            # conservative default (v7x-sized)
    try:
        info = pltpu.get_tpu_info()
        cap = int(getattr(info, "vmem_capacity_bytes", cap))
    except Exception:
        pass
    if cap <= 64 * 2**20:       # v7x-class: leave headroom for Mosaic scratch
        return int(cap * 3 // 4)
    return int(min(cap * 3 // 4, 100 * 2**20))   # v5e/v6e 128 MiB parts


def fold_bn(gamma, beta, mean, var, eps=1e-5):
    scale = gamma / jnp.sqrt(var + eps)
    return scale, beta - mean * scale


def adaptive_pool_matrix(H, W, sizes):
    """Rows = pooled cells of every pyramid level (PyTorch AdaptiveAvgPool2d
    bins), columns = flattened H*W pixels; each row averages its bin."""
    rows = []
    for s in sizes:
        for i in range(s):
            y0, y1 = (i * H) // s, ((i + 1) * H + s - 1) // s
            for j in range(s):
                x0, x1 = (j * W) // s, ((j + 1) * W + s - 1) // s
                m = np.zeros((H, W), np.float64)
                m[y0:y1, x0:x1] = 1.0 / ((y1 - y0) * (x1 - x0))
                rows.append(m.reshape(-1))
    return np.stack(rows, axis=0)                       # [R, H*W], R = sum(s*s)


def bilinear_upsample_matrix(H, W, sizes):
    """align_corners=True bilinear interpolation from each (s, s) grid to
    (H, W); stage blocks concatenated along columns -> [H*W, sum(s*s)]."""
    blocks = []
    for s in sizes:
        U = np.zeros((H * W, s * s), np.float64)
        if s == 1:
            U[:, 0] = 1.0
        else:
            for h in range(H):
                sy = h * (s - 1) / (H - 1)
                y0 = min(int(np.floor(sy)), s - 2)
                wy = sy - y0
                for w in range(W):
                    sx = w * (s - 1) / (W - 1)
                    x0 = min(int(np.floor(sx)), s - 2)
                    wx = sx - x0
                    p = h * W + w
                    U[p, y0 * s + x0] += (1.0 - wy) * (1.0 - wx)
                    U[p, y0 * s + x0 + 1] += (1.0 - wy) * wx
                    U[p, (y0 + 1) * s + x0] += wy * (1.0 - wx)
                    U[p, (y0 + 1) * s + x0 + 1] += wy * wx
        blocks.append(U)
    return np.concatenate(blocks, axis=1)               # [H*W, R]


# ----------------------------- Pallas kernels --------------------------------

def _adaptive_pool_kernel(x_ref, p_ref, o_ref):
    """pooled^T[n] += x_tile^T @ poolT_tile   (pooling-as-matmul, spatial
    reduction; Cin on the MXU M axis, spatial on lanes)."""
    @pl.when(pl.program_id(1) == 0)
    def _():
        o_ref[...] = jnp.zeros_like(o_ref)

    o_ref[0] += jnp.dot(x_ref[0], p_ref[...], preferred_element_type=jnp.float32)


def adaptive_pool_all(x3, poolT, *, tile):
    """x3: [N, Cin, HWp] bf16, poolT: [HWp, R] bf16 -> pooled^T [N, Cin, R] f32."""
    N, Cin, HWp = x3.shape
    R = poolT.shape[1]
    return pl.pallas_call(
        _adaptive_pool_kernel,
        out_shape=jax.ShapeDtypeStruct((N, Cin, R), jnp.float32),
        grid_spec=pltpu.PrefetchScalarGridSpec(
            num_scalar_prefetch=0,
            grid=(N, HWp // tile),
            in_specs=[
                pl.BlockSpec((1, Cin, tile), lambda n, t: (n, 0, t)),
                pl.BlockSpec((tile, R), lambda n, t: (t, 0)),
            ],
            out_specs=pl.BlockSpec((1, Cin, R), lambda n, t: (n, 0, 0)),
        ),
        compiler_params=pltpu.CompilerParams(
            dimension_semantics=("parallel", "arbitrary"),
            vmem_limit_bytes=_vmem_limit_bytes(),
        ),
    )(x3, poolT)


def bottleneck_matmul(x3, uT, gT, wxT, scale, bias, *, tile, tk_target=1024):
    """Fused PSP bottleneck in transposed (NCHW-friendly) layout.

    x3:    [N, Cin, HWp] bf16   (spatial on lanes)
    uT:    [R, HWp]      f32    align_corners bilinear matrix (all stages), transposed
    gT:    [N, Cb, R]    f32    stage conv+BN outputs folded with the stage blocks
                                of the bottleneck weight, transposed
    wxT:   [Cb, Cin]     bf16   bottleneck weight block acting on raw feats (resident)
    scale/bias: [Cb, 1]  f32    folded bottleneck BatchNorm
    returns out^T: [N, Cb, HWp] f32  =  relu(scale*(wxT@x^T + gT@uT) + bias)
    """
    N, Cin, HWp = x3.shape
    R = uT.shape[0]
    Cb = wxT.shape[0]
    tm = tile
    tk = _pick_k_tile(Cin, tk_target)
    nk = Cin // tk

    def kernel(x_ref, u_ref, g_ref, wx_ref, sc_ref, bi_ref, o_ref):
        k = pl.program_id(2)

        @pl.when(k == 0)
        def _():
            # Pyramid prior contribution (tiny K = R; kept in f32 for accuracy).
            o_ref[0] = jnp.dot(g_ref[0], u_ref[...],
                               preferred_element_type=jnp.float32)

        # Identity (feats) branch of the 1x1 conv; the weight is resident in
        # VMEM (constant index_map) and sliced here instead of re-DMA'd per tile.
        if nk == 1:
            w_blk = wx_ref[...]
        else:
            start = pl.multiple_of(k * tk, tk)
            w_blk = wx_ref[:, pl.ds(start, tk)]
        o_ref[0] += jnp.dot(w_blk, x_ref[0], preferred_element_type=jnp.float32)

        @pl.when(k == nk - 1)
        def _():
            o_ref[0] = jnp.maximum(o_ref[0] * sc_ref[...] + bi_ref[...], 0.0)

    return pl.pallas_call(
        kernel,
        out_shape=jax.ShapeDtypeStruct((N, Cb, HWp), jnp.float32),
        grid_spec=pltpu.PrefetchScalarGridSpec(
            num_scalar_prefetch=0,
            grid=(N, HWp // tm, nk),
            in_specs=[
                pl.BlockSpec((1, tk, tm), lambda n, t, k: (n, k, t)),
                pl.BlockSpec((R, tm), lambda n, t, k: (0, t)),
                pl.BlockSpec((1, Cb, R), lambda n, t, k: (n, 0, 0)),
                pl.BlockSpec((Cb, Cin), lambda n, t, k: (0, 0)),   # resident weight
                pl.BlockSpec((Cb, 1), lambda n, t, k: (0, 0)),
                pl.BlockSpec((Cb, 1), lambda n, t, k: (0, 0)),
            ],
            out_specs=pl.BlockSpec((1, Cb, tm), lambda n, t, k: (n, 0, t)),
        ),
        compiler_params=pltpu.CompilerParams(
            dimension_semantics=("parallel", "parallel", "arbitrary"),
            vmem_limit_bytes=_vmem_limit_bytes(),
        ),
    )(x3, uT, gT, wxT, scale, bias)


# ------------------------------ parameters -----------------------------------

def init_params(key, features, out_features, sizes):
    """Deterministic synthetic parameters in PyTorch layouts ([Cout, Cin, 1, 1])."""
    n_stage = len(sizes)
    keys = jax.random.split(key, 2 * n_stage + 2)

    def bn_params(k, c):
        kg, kb, km, kv = jax.random.split(k, 4)
        gamma = jax.random.uniform(kg, (c,), minval=0.5, maxval=1.5)
        beta = 0.1 * jax.random.normal(kb, (c,))
        mean = 0.1 * jax.random.normal(km, (c,))
        var = jax.random.uniform(kv, (c,), minval=0.5, maxval=1.5)
        return tuple(a.astype(jnp.float32) for a in (gamma, beta, mean, var))

    w_stage = [0.1 * jax.random.normal(keys[i], (out_features, features, 1, 1),
                                       dtype=jnp.float32) for i in range(n_stage)]
    bn_stage = [bn_params(keys[n_stage + i], out_features) for i in range(n_stage)]
    k_in = features + n_stage * out_features
    w_b = 0.1 * jax.random.normal(keys[2 * n_stage], (out_features, k_in, 1, 1),
                                  dtype=jnp.float32)
    bn_b = bn_params(keys[2 * n_stage + 1], out_features)
    return {"sizes": tuple(sizes), "w_stage": w_stage, "bn_stage": bn_stage,
            "w_bottleneck": w_b, "bn_bottleneck": bn_b}


# ------------------------------- forward -------------------------------------

def psp_forward(x_nchw, params):
    """PSPModule forward (inference): [N, Cin, H, W] -> [N, Cb, H+2, W+2]."""
    N, Cin, H, W = x_nchw.shape
    sizes = params["sizes"]
    n_stage = len(sizes)
    Cout = params["w_stage"][0].shape[0]
    HW = H * W
    HWp, sp_tile = _spatial_tiling(HW)

    # NCHW already has spatial as the minor axis: reshape is free, one bf16
    # cast materializes the single x stream shared by both kernels.
    x3 = x_nchw.reshape(N, Cin, HW).astype(jnp.bfloat16)
    if HWp != HW:
        x3 = jnp.pad(x3, ((0, 0), (0, 0), (0, HWp - HW)))

    pool_np = adaptive_pool_matrix(H, W, sizes)            # [R, HW]
    interp_np = bilinear_upsample_matrix(H, W, sizes)      # [HW, R]
    R = pool_np.shape[0]
    poolT_np = np.zeros((HWp, R), np.float32); poolT_np[:HW, :] = pool_np.T
    uT_np = np.zeros((R, HWp), np.float32);    uT_np[:, :HW] = interp_np.T
    poolT = jnp.asarray(poolT_np, jnp.bfloat16)
    uT = jnp.asarray(uT_np, jnp.float32)

    # ---- Pallas kernel 1: all pyramid adaptive average pools in one pass over x.
    pooled = adaptive_pool_all(x3, poolT, tile=sp_tile)    # [N, Cin, R] f32

    # ---- Tiny per-stage 1x1 conv + folded BN, then fold against the matching
    #      bottleneck-weight block (stage has no ReLU -> exact).  <= 36 cells
    #      per stage, so plain JAX instead of degenerate MXU calls.
    wb = params["w_bottleneck"][:, :, 0, 0]                # [Cb, Cin + n_stage*Cout]
    gT_blocks = []
    off = 0
    for idx, s in enumerate(sizes):
        w_s = params["w_stage"][idx][:, :, 0, 0]           # [Cout, Cin]
        sc_s, bi_s = fold_bn(*params["bn_stage"][idx])
        z = jnp.einsum('oc,ncr->nor', w_s, pooled[:, :, off:off + s * s])
        z = z * sc_s[None, :, None] + bi_s[None, :, None]  # [N, Cout, s*s]
        wb_s = wb[:, idx * Cout:(idx + 1) * Cout]          # [Cb, Cout]
        gT_blocks.append(jnp.einsum('bo,nor->nbr', wb_s, z))
        off += s * s
    gT = jnp.concatenate(gT_blocks, axis=2)                # [N, Cb, R] f32

    wxT = wb[:, n_stage * Cout:].astype(jnp.bfloat16)      # [Cb, Cin]
    scale_b, bias_b = fold_bn(*params["bn_bottleneck"])
    Cb = wxT.shape[0]

    # ---- Pallas kernel 2: fused transposed bottleneck matmul + BN + ReLU.
    out_t = bottleneck_matmul(
        x3, uT, gT, wxT,
        scale_b.reshape(Cb, 1).astype(jnp.float32),
        bias_b.reshape(Cb, 1).astype(jnp.float32),
        tile=sp_tile)                                      # [N, Cb, HWp] f32
    interior = out_t[:, :, :HW].reshape(N, Cb, H, W)       # NCHW, no transpose

    # Conv2d(kernel_size=1, padding=1): the 1-pixel border only sees the zero
    # padding, so after BN + ReLU it is exactly relu(bn_bias).
    border = jnp.maximum(bias_b, 0.0).reshape(1, Cb, 1, 1)
    out = jnp.broadcast_to(border, (N, Cb, H + 2, W + 2))
    out = out.at[:, :, 1:H + 1, 1:W + 1].set(interior)

    # TODO(synk): Dropout2d(0.1) is inference-mode identity here (training-time
    # channel dropout would need an RNG key threaded through the forward).
    return out                                             # NCHW


# -------------------------- pure-JAX reference -------------------------------

def ref_forward(x, params, eps=1e-5):
    N, Cin, H, W = x.shape
    sizes = params["sizes"]

    def bn(y, p):
        gamma, beta, mean, var = p
        sc = gamma / jnp.sqrt(var + eps)
        return (y - mean[None, :, None, None]) * sc[None, :, None, None] \
            + beta[None, :, None, None]

    def conv1x1(y, w, padding=0):
        return lax.conv_general_dilated(
            y, w, window_strides=(1, 1),
            padding=[(padding, padding), (padding, padding)],
            dimension_numbers=("NCHW", "OIHW", "NCHW"))

    def adaptive_avg_pool(y, s):
        rows = []
        for i in range(s):
            y0, y1 = (i * H) // s, ((i + 1) * H + s - 1) // s
            cols = []
            for j in range(s):
                x0, x1 = (j * W) // s, ((j + 1) * W + s - 1) // s
                cols.append(jnp.mean(y[:, :, y0:y1, x0:x1], axis=(2, 3)))
            rows.append(jnp.stack(cols, axis=-1))
        return jnp.stack(rows, axis=-2)                       # [N, C, s, s]

    def upsample_align_corners(y, H_out, W_out):
        n, c, s, _ = y.shape
        if s == 1:
            return jnp.broadcast_to(y, (n, c, H_out, W_out))
        yy = jnp.arange(H_out) * (s - 1) / (H_out - 1)
        xx = jnp.arange(W_out) * (s - 1) / (W_out - 1)
        YY, XX = jnp.meshgrid(yy, xx, indexing="ij")
        flat = y.reshape(n * c, s, s)
        out = jax.vmap(lambda img: map_coordinates(img, [YY, XX], order=1,
                                                   mode="nearest"))(flat)
        return out.reshape(n, c, H_out, W_out)

    priors = []
    for idx, s in enumerate(sizes):
        p = adaptive_avg_pool(x, s)
        p = bn(conv1x1(p, params["w_stage"][idx]), params["bn_stage"][idx])
        priors.append(upsample_align_corners(p, H, W))
    priors.append(x)
    cat = jnp.concatenate(priors, axis=1)
    y = conv1x1(cat, params["w_bottleneck"], padding=1)       # -> (H+2, W+2)
    y = bn(y, params["bn_bottleneck"])
    return jnp.maximum(y, 0.0)                                # Dropout2d -> identity


# ----------------------------------- main ------------------------------------

if __name__ == "__main__":
    key = jax.random.PRNGKey(0)
    kx, kp = jax.random.split(key)

    N, Cin, H, W = 2, 4, 16, 16
    out_features = 32
    sizes = (1, 2, 3, 6)

    x = jax.random.normal(kx, (N, Cin, H, W), dtype=jnp.float32)
    params = init_params(kp, Cin, out_features, sizes)

    fwd = jax.jit(lambda xx: psp_forward(xx, params))
    out = jax.block_until_ready(fwd(x))
    expected_shape = (N, out_features, H + 2, W + 2)
    assert out.shape == expected_shape, (out.shape, expected_shape)

    ref = jax.block_until_ready(ref_forward(x, params))
    max_err = float(jnp.max(jnp.abs(out - ref)))
    # bf16 x / pool / weight streams -> compare at bf16-appropriate tolerance.
    assert jnp.allclose(out, ref, rtol=2e-2, atol=2e-2), max_err

    print("KERNEL_OK")
</pallas_src>

<mosaic_0001>
module attributes {stable_mosaic.version = 11 : i64} {
  func.func @_adaptive_pool_kernel(%arg0: i32, %arg1: i32, %arg2: memref<1x4x256xbf16, #tpu.memory_space<vmem>>, %arg3: memref<256x50xbf16, #tpu.memory_space<vmem>>, %arg4: memref<1x4x50xf32, #tpu.memory_space<vmem>>) attributes {dimension_semantics = [#tpu.dimension_semantics<parallel>, #tpu.dimension_semantics<arbitrary>], iteration_bounds = array<i64: 2, 1>, scalar_prefetch = 0 : i64, scratch_operands = 0 : i64, tpu.core_type = #tpu.core_type<tc>, window_params = [{transform_indices = @transform_0, window_bounds = array<i64: 1, 4, 256>}, {transform_indices = @transform_1, window_bounds = array<i64: 256, 50>}, {transform_indices = @transform_2, window_bounds = array<i64: 1, 4, 50>}]} {
    %c0_i32 = arith.constant 0 : i32
    %0 = arith.cmpi eq, %arg1, %c0_i32 : i32
    %1 = arith.extui %0 : i1 to i32
    %c0_i32_0 = arith.constant 0 : i32
    %2 = arith.cmpi ne, %1, %c0_i32_0 : i32
    scf.if %2 {
      %cst_11 = arith.constant 0.000000e+00 : f32
      %13 = vector.broadcast %cst_11 : f32 to vector<1x4x50xf32>
      %c0_12 = arith.constant 0 : index
      %c0_13 = arith.constant 0 : index
      %c0_14 = arith.constant 0 : index
      %14 = vector.load %arg4[%c0_12, %c0_13, %c0_14] : memref<1x4x50xf32, #tpu.memory_space<vmem>>, vector<1x4x50xf32>
      tpu.vector_store %arg4[%c0_12, %c0_13, %c0_14], %13 {strides = array<i32>} : memref<1x4x50xf32, #tpu.memory_space<vmem>>, vector<1x4x50xf32>,
    } else {
    }
    %c0 = arith.constant 0 : index
    %c0_1 = arith.constant 0 : index
    %c0_2 = arith.constant 0 : index
    %3 = vector.load %arg4[%c0, %c0_1, %c0_2] : memref<1x4x50xf32, #tpu.memory_space<vmem>>, vector<1x4x50xf32>
    %4 = vector.shape_cast %3 : vector<1x4x50xf32> to vector<4x50xf32>
    %c0_3 = arith.constant 0 : index
    %c0_4 = arith.constant 0 : index
    %c0_5 = arith.constant 0 : index
    %5 = vector.load %arg2[%c0_3, %c0_4, %c0_5] : memref<1x4x256xbf16, #tpu.memory_space<vmem>>, vector<1x4x256xbf16>
    %6 = vector.shape_cast %5 : vector<1x4x256xbf16> to vector<4x256xbf16>
    %c0_6 = arith.constant 0 : index
    %c0_7 = arith.constant 0 : index
    %7 = vector.load %arg3[%c0_6, %c0_7] : memref<256x50xbf16, #tpu.memory_space<vmem>>, vector<256x50xbf16>
    %cst = arith.constant dense<0.000000e+00> : vector<4x50xf32>
    %8 = tpu.matmul %6, %7, %cst {dimension_numbers = #tpu.dot_dimension_numbers<[1], [0], [0], [1], [0, 0, 1, 1], [], []>} : vector<4x256xbf16>, vector<256x50xbf16>, vector<4x50xf32> -> vector<4x50xf32>
    %9 = arith.addf %4, %8 : vector<4x50xf32>
    %c0_8 = arith.constant 0 : index
    %c0_9 = arith.constant 0 : index
    %c0_10 = arith.constant 0 : index
    %10 = vector.load %arg4[%c0_8, %c0_9, %c0_10] : memref<1x4x50xf32, #tpu.memory_space<vmem>>, vector<1x4x50xf32>
    %11 = vector.shape_cast %10 : vector<1x4x50xf32> to vector<4x50xf32>
    %12 = vector.shape_cast %9 : vector<4x50xf32> to vector<1x4x50xf32>
    tpu.vector_store %arg4[%c0_8, %c0_9, %c0_10], %12 {strides = array<i32>} : memref<1x4x50xf32, #tpu.memory_space<vmem>>, vector<1x4x50xf32>,
    return
  }
  func.func @transform_0(%arg0: i32, %arg1: i32) -> (i32, i32, i32) {
    %c0_i32 = arith.constant 0 : i32
    %c0_i32_0 = arith.constant 0 : i32
    return %arg0, %c0_i32, %arg1 : i32, i32, i32
  }
  func.func @transform_1(%arg0: i32, %arg1: i32) -> (i32, i32) {
    %c0_i32 = arith.constant 0 : i32
    %c0_i32_0 = arith.constant 0 : i32
    return %arg1, %c0_i32 : i32, i32
  }
  func.func @transform_2(%arg0: i32, %arg1: i32) -> (i32, i32, i32) {
    %c0_i32 = arith.constant 0 : i32
    %c0_i32_0 = arith.constant 0 : i32
    %c0_i32_1 = arith.constant 0 : i32
    return %arg0, %c0_i32, %c0_i32_0 : i32, i32, i32
  }
}

module attributes {stable_mosaic.version = 11 : i64} {
  func.func @kernel(%arg0: i32, %arg1: i32, %arg2: i32, %arg3: memref<1x4x256xbf16, #tpu.memory_space<vmem>>, %arg4: memref<50x256xf32, #tpu.memory_space<vmem>>, %arg5: memref<1x32x50xf32, #tpu.memory_space<vmem>>, %arg6: memref<32x4xbf16, #tpu.memory_space<vmem>>, %arg7: memref<32x1xf32, #tpu.memory_space<vmem>>, %arg8: memref<32x1xf32, #tpu.memory_space<vmem>>, %arg9: memref<1x32x256xf32, #tpu.memory_space<vmem>>) attributes {dimension_semantics = [#tpu.dimension_semantics<parallel>, #tpu.dimension_semantics<parallel>, #tpu.dimension_semantics<arbitrary>], iteration_bounds = array<i64: 2, 1, 1>, scalar_prefetch = 0 : i64, scratch_operands = 0 : i64, tpu.core_type = #tpu.core_type<tc>, window_params = [{transform_indices = @transform_0, window_bounds = array<i64: 1, 4, 256>}, {transform_indices = @transform_1, window_bounds = array<i64: 50, 256>}, {transform_indices = @transform_2, window_bounds = array<i64: 1, 32, 50>}, {pipeline_mode = #tpu.pipeline_mode<synchronous>, transform_indices = @transform_3, window_bounds = array<i64: 32, 4>}, {pipeline_mode = #tpu.pipeline_mode<synchronous>, transform_indices = @transform_4, window_bounds = array<i64: 32, 1>}, {pipeline_mode = #tpu.pipeline_mode<synchronous>, transform_indices = @transform_5, window_bounds = array<i64: 32, 1>}, {transform_indices = @transform_6, window_bounds = array<i64: 1, 32, 256>}]} {
    %c0_i32 = arith.constant 0 : i32
    %0 = arith.cmpi eq, %arg2, %c0_i32 : i32
    %1 = arith.extui %0 : i1 to i32
    %c0_i32_0 = arith.constant 0 : i32
    %2 = arith.cmpi ne, %1, %c0_i32_0 : i32
    scf.if %2 {
      %c0_13 = arith.constant 0 : index
      %c0_14 = arith.constant 0 : index
      %c0_15 = arith.constant 0 : index
      %16 = vector.load %arg5[%c0_13, %c0_14, %c0_15] : memref<1x32x50xf32, #tpu.memory_space<vmem>>, vector<1x32x50xf32>
      %17 = vector.shape_cast %16 : vector<1x32x50xf32> to vector<32x50xf32>
      %c0_16 = arith.constant 0 : index
      %c0_17 = arith.constant 0 : index
      %18 = vector.load %arg4[%c0_16, %c0_17] : memref<50x256xf32, #tpu.memory_space<vmem>>, vector<50x256xf32>
      %cst_18 = arith.constant dense<0.000000e+00> : vector<32x256xf32>
      %19 = tpu.matmul %17, %18, %cst_18 {dimension_numbers = #tpu.dot_dimension_numbers<[1], [0], [0], [1], [0, 0, 1, 1], [], []>} : vector<32x50xf32>, vector<50x256xf32>, vector<32x256xf32> -> vector<32x256xf32>
      %c0_19 = arith.constant 0 : index
      %c0_20 = arith.constant 0 : index
      %c0_21 = arith.constant 0 : index
      %20 = vector.load %arg9[%c0_19, %c0_20, %c0_21] : memref<1x32x256xf32, #tpu.memory_space<vmem>>, vector<1x32x256xf32>
      %21 = vector.shape_cast %20 : vector<1x32x256xf32> to vector<32x256xf32>
      %22 = vector.shape_cast %19 : vector<32x256xf32> to vector<1x32x256xf32>
      tpu.vector_store %arg9[%c0_19, %c0_20, %c0_21], %22 {strides = array<i32>} : memref<1x32x256xf32, #tpu.memory_space<vmem>>, vector<1x32x256xf32>,
    } else {
    }
    %c0 = arith.constant 0 : index
    %c0_1 = arith.constant 0 : index
    %3 = vector.load %arg6[%c0, %c0_1] : memref<32x4xbf16, #tpu.memory_space<vmem>>, vector<32x4xbf16>
    %c0_2 = arith.constant 0 : index
    %c0_3 = arith.constant 0 : index
    %c0_4 = arith.constant 0 : index
    %4 = vector.load %arg9[%c0_2, %c0_3, %c0_4] : memref<1x32x256xf32, #tpu.memory_space<vmem>>, vector<1x32x256xf32>
    %5 = vector.shape_cast %4 : vector<1x32x256xf32> to vector<32x256xf32>
    %c0_5 = arith.constant 0 : index
    %c0_6 = arith.constant 0 : index
    %c0_7 = arith.constant 0 : index
    %6 = vector.load %arg3[%c0_5, %c0_6, %c0_7] : memref<1x4x256xbf16, #tpu.memory_space<vmem>>, vector<1x4x256xbf16>
    %7 = vector.shape_cast %6 : vector<1x4x256xbf16> to vector<4x256xbf16>
    %cst = arith.constant dense<0.000000e+00> : vector<32x256xf32>
    %8 = tpu.matmul %3, %7, %cst {dimension_numbers = #tpu.dot_dimension_numbers<[1], [0], [0], [1], [0, 0, 1, 1], [], []>} : vector<32x4xbf16>, vector<4x256xbf16>, vector<32x256xf32> -> vector<32x256xf32>
    %9 = arith.addf %5, %8 : vector<32x256xf32>
    %c0_8 = arith.constant 0 : index
    %c0_9 = arith.constant 0 : index
    %c0_10 = arith.constant 0 : index
    %10 = vector.load %arg9[%c0_8, %c0_9, %c0_10] : memref<1x32x256xf32, #tpu.memory_space<vmem>>, vector<1x32x256xf32>
    %11 = vector.shape_cast %10 : vector<1x32x256xf32> to vector<32x256xf32>
    %12 = vector.shape_cast %9 : vector<32x256xf32> to vector<1x32x256xf32>
    tpu.vector_store %arg9[%c0_8, %c0_9, %c0_10], %12 {strides = array<i32>} : memref<1x32x256xf32, #tpu.memory_space<vmem>>, vector<1x32x256xf32>,
    %c0_i32_11 = arith.constant 0 : i32
    %13 = arith.cmpi eq, %arg2, %c0_i32_11 : i32
    %14 = arith.extui %13 : i1 to i32
    %c0_i32_12 = arith.constant 0 : i32
    %15 = arith.cmpi ne, %14, %c0_i32_12 : i32
    scf.if %15 {
      %c0_13 = arith.constant 0 : index
      %c0_14 = arith.constant 0 : index
      %c0_15 = arith.constant 0 : index
      %16 = vector.load %arg9[%c0_13, %c0_14, %c0_15] : memref<1x32x256xf32, #tpu.memory_space<vmem>>, vector<1x32x256xf32>
      %17 = vector.shape_cast %16 : vector<1x32x256xf32> to vector<32x256xf32>
      %c0_16 = arith.constant 0 : index
      %c0_17 = arith.constant 0 : index
      %18 = vector.load %arg7[%c0_16, %c0_17] : memref<32x1xf32, #tpu.memory_space<vmem>>, vector<32x1xf32>
      %19 = vector.broadcast %18 : vector<32x1xf32> to vector<32x256xf32>
      %20 = arith.mulf %17, %19 : vector<32x256xf32>
      %c0_18 = arith.constant 0 : index
      %c0_19 = arith.constant 0 : index
      %21 = vector.load %arg8[%c0_18, %c0_19] : memref<32x1xf32, #tpu.memory_space<vmem>>, vector<32x1xf32>
      %22 = vector.broadcast %21 : vector<32x1xf32> to vector<32x256xf32>
      %23 = arith.addf %20, %22 : vector<32x256xf32>
      %cst_20 = arith.constant 0.000000e+00 : f32
      %24 = vector.broadcast %cst_20 : f32 to vector<32x256xf32>
      %25 = arith.maximumf %23, %24 : vector<32x256xf32>
      %c0_21 = arith.constant 0 : index
      %c0_22 = arith.constant 0 : index
      %c0_23 = arith.constant 0 : index
      %26 = vector.load %arg9[%c0_21, %c0_22, %c0_23] : memref<1x32x256xf32, #tpu.memory_space<vmem>>, vector<1x32x256xf32>
      %27 = vector.shape_cast %26 : vector<1x32x256xf32> to vector<32x256xf32>
      %28 = vector.shape_cast %25 : vector<32x256xf32> to vector<1x32x256xf32>
      tpu.vector_store %arg9[%c0_21, %c0_22, %c0_23], %28 {strides = array<i32>} : memref<1x32x256xf32, #tpu.memory_space<vmem>>, vector<1x32x256xf32>,
    } else {
    }
    return
  }
  func.func @transform_0(%arg0: i32, %arg1: i32, %arg2: i32) -> (i32, i32, i32) {
    %c0_i32 = arith.constant 0 : i32
    return %arg0, %arg2, %arg1 : i32, i32, i32
  }
  func.func @transform_1(%arg0: i32, %arg1: i32, %arg2: i32) -> (i32, i32) {
    %c0_i32 = arith.constant 0 : i32
    %c0_i32_0 = arith.constant 0 : i32
    return %c0_i32, %arg1 : i32, i32
  }
  func.func @transform_2(%arg0: i32, %arg1: i32, %arg2: i32) -> (i32, i32, i32) {
    %c0_i32 = arith.constant 0 : i32
    %c0_i32_0 = arith.constant 0 : i32
    %c0_i32_1 = arith.constant 0 : i32
    return %arg0, %c0_i32, %c0_i32_0 : i32, i32, i32
  }
  func.func @transform_3(%arg0: i32, %arg1: i32, %arg2: i32) -> (i32, i32) {
    %c0_i32 = arith.constant 0 : i32
    %c0_i32_0 = arith.constant 0 : i32
    %c0_i32_1 = arith.constant 0 : i32
    return %c0_i32, %c0_i32_0 : i32, i32
  }
  func.func @transform_4(%arg0: i32, %arg1: i32, %arg2: i32) -> (i32, i32) {
    %c0_i32 = arith.constant 0 : i32
    %c0_i32_0 = arith.constant 0 : i32
    %c0_i32_1 = arith.constant 0 : i32
    return %c0_i32, %c0_i32_0 : i32, i32
  }
  func.func @transform_5(%arg0: i32, %arg1: i32, %arg2: i32) -> (i32, i32) {
    %c0_i32 = arith.constant 0 : i32
    %c0_i32_0 = arith.constant 0 : i32
    %c0_i32_1 = arith.constant 0 : i32
    return %c0_i32, %c0_i32_0 : i32, i32
  }
  func.func @transform_6(%arg0: i32, %arg1: i32, %arg2: i32) -> (i32, i32, i32) {
    %c0_i32 = arith.constant 0 : i32
    %c0_i32_0 = arith.constant 0 : i32
    return %arg0, %c0_i32, %arg1 : i32, i32, i32
  }
}

</mosaic_0001>

<llo_original>
// kernel: _lambda_.2
$region0: #{_lambda_.2}
  #allocation0 [shape = 'u32[]', space=smem, size = 0x4, offset = 0x4, fixed_abs, tag = 'smem constant byte address 0x4 - core index']
  #allocation1 [shape = 'u32[72,128]{1,0:T(1,128)}', space=vmem, size = 0x9000, scoped, tag = 'internal scratch']
  %s0 = inlined_call_operand.vmem [shape: bf16[2,4,256], index: 0, kind: input, shape index: {}]
  %s1 = inlined_call_operand.vmem [shape: bf16[256,50], index: 1, kind: input, shape index: {}]
  %s2 = inlined_call_operand.vmem [shape: f32[2,4,50], index: 2, kind: output, shape index: {}]
  %s3 = sld [smem:[#allocation0]]
  $region45: #{_lambda_.2} parent=0
    _
  %s5 = ssub.s32 1, %s3
  %s6 = scalar_select 0, %s5, %s3
  loop: start=0, step=1, limit=4
  $region2: #{_lambda_.2} parent=0 // loop_pre_header
    _
  $region3: #{_lambda_.2} parent=0 // loop_header
    %s8 = sphi 0, %s12
    %p9 = scmp.ge.s32.totalorder %s8, 4
    %s15 = sphi 0, %s27
    %s16 = sphi 0, %s23
    %s17 = sphi 0, %s15
    %s18 = sphi 0, %s16
    %s19 = sphi 0, %s17
    %s20 = sphi 0, %s18
    %s32 = sphi 0, %s34
    %s35 = sphi 0, %s32
    %s36 = sphi 0, %s35
    %s52 = sphi 0, %s36
    %s58 = sphi 0, %s60
    %s61 = sphi 0, %s58
    %s62 = sphi 0, %s61
    %s78 = sphi 0, %s62
    %s84 = sphi 0, %s86
    %s87 = sphi 0, %s84
    %s88 = sphi 0, %s87
    %s104 = sphi 0, %s88
  $region4: #{_lambda_.2} parent=0 // loop_header_branch
    %11 = sbr.rel (%p9) target = $region8
  $region5: #{_lambda_.2} parent=0 // loop_body
    %s13 = ssub.s32 %s8, 1
    %s14 = ssub.s32 %s8, 2
    %s21 = sadd.s32 1, %s16
    %p22 = scmp.ge.s32.totalorder %s21, 1
    %s23 = scalar_select %p22, 0, %s21
    %s24 = sadd.s32 1, %s15
    %s25 = scalar_select %p22, %s24, %s15
    %p26 = scmp.ge.s32.totalorder %s25, 2
    %s27 = scalar_select %p26, 0, %s25
    %s28 = ssub.s32 %s15, %s27
    %s29 = ssub.s32 %s16, %s23
    %s30 = sor.u32 %s28, %s29
    %p31 = scmp.eq.s32.totalorder %s30, 0
    %s33 = sadd.s32 %s32, 1
    %s34 = scalar_select %p31, %s32, %s33
    %p37 = pneg %p31
    %p38 = scmp.eq.s32.totalorder %s8, 1
    %p39 = por %p37, %p38
    %p40 = scmp.ne.s32.totalorder %s32, %s35
    %p41 = scmp.eq.s32.totalorder %s8, 0
    %p42 = por %p40, %p41
    %p43 = scmp.ne.s32.totalorder %s32, %s35
    %p44 = scmp.eq.s32.totalorder %s13, 1
    %p45 = por %p43, %p44
    %p46 = scmp.ne.s32.totalorder %s35, %s36
    %p47 = scmp.eq.s32.totalorder %s13, 0
    %p48 = por %p46, %p47
    %p49 = scmp.ne.s32.totalorder %s35, %s36
    %p50 = scmp.eq.s32.totalorder %s14, 1
    %p51 = por %p49, %p50
    %p53 = scmp.ne.s32.totalorder %s36, %s52
    %p54 = scmp.eq.s32.totalorder %s14, 0
    %p55 = por %p53, %p54
    %s56 = ssub.s32 %s16, %s23
    %p57 = scmp.eq.s32.totalorder %s56, 0
    %s59 = sadd.s32 %s58, 1
    %s60 = scalar_select %p57, %s58, %s59
    %p63 = pneg %p57
    %p64 = scmp.eq.s32.totalorder %s8, 1
    %p65 = por %p63, %p64
    %p66 = scmp.ne.s32.totalorder %s58, %s61
    %p67 = scmp.eq.s32.totalorder %s8, 0
    %p68 = por %p66, %p67
    %p69 = scmp.ne.s32.totalorder %s58, %s61
    %p70 = scmp.eq.s32.totalorder %s13, 1
    %p71 = por %p69, %p70
    %p72 = scmp.ne.s32.totalorder %s61, %s62
    %p73 = scmp.eq.s32.totalorder %s13, 0
    %p74 = por %p72, %p73
    %p75 = scmp.ne.s32.totalorder %s61, %s62
    %p76 = scmp.eq.s32.totalorder %s14, 1
    %p77 = por %p75, %p76
    %p79 = scmp.ne.s32.totalorder %s62, %s78
    %p80 = scmp.eq.s32.totalorder %s14, 0
    %p81 = por %p79, %p80
    %s82 = ssub.s32 %s15, %s27
    %p83 = scmp.eq.s32.totalorder %s82, 0
    %s85 = sadd.s32 %s84, 1
    %s86 = scalar_select %p83, %s84, %s85
    %p89 = pneg %p83
    %p90 = scmp.eq.s32.totalorder %s8, 1
    %p91 = por %p89, %p90
    %p92 = scmp.ne.s32.totalorder %s84, %s87
    %p93 = scmp.eq.s32.totalorder %s8, 0
    %p94 = por %p92, %p93
    %p95 = scmp.ne.s32.totalorder %s84, %s87
    %p96 = scmp.eq.s32.totalorder %s13, 1
    %p97 = por %p95, %p96
    %p98 = scmp.ne.s32.totalorder %s87, %s88
    %p99 = scmp.eq.s32.totalorder %s13, 0
    %p100 = por %p98, %p99
    %p101 = scmp.ne.s32.totalorder %s87, %s88
    %p102 = scmp.eq.s32.totalorder %s14, 1
    %p103 = por %p101, %p102
    %p105 = scmp.ne.s32.totalorder %s88, %s104
    %p106 = scmp.eq.s32.totalorder %s14, 0
    %p107 = por %p105, %p106
    %p108 = scmp.le.s32.totalorder 1, %s8
    %p109 = scmp.lt.s32.totalorder %s8, 3
    %p110 = pnand %p108, %p109
    %p111 = pneg %p110
    // Predicated region
    $region9: #{_lambda_.2} parent=5 // pred_check
      _
    $region10: #{_lambda_.2} parent=5 // pred_check_branch
      %113 = sbr.rel (%p110) target = $region12
    $region11: #{_lambda_.2} parent=5 // pred_region
      %s114 = ssub.s32 %s8, 1
      // Predicated region
      $region13: #{_lambda_.2} parent=11 // pred_check
        %p115 = pneg %p74
      $region14: #{_lambda_.2} parent=11 // pred_check_branch
        %117 = sbr.rel (%p115) target = $region16
      $region15: #{_lambda_.2} parent=11 // pred_region
        %s118 = smul.u32 32, %s18
        %p119 = scmp.lt.s32.totalorder %s118, 31
        %s120 = scalar_select %p119, %s118, 31
        %s121 = smul.addr %s120, 4
        %s122 = scalar_lea.vmem %s1, %s121
        %s123 = smul.u32 32, %s18
      $region16: #{_lambda_.2} parent=11 // pred_fallthru
        _
    $region12: #{_lambda_.2} parent=5 // pred_fallthru
      _
    %p124 = scmp.lt.s32.totalorder %s8, 2
    // Predicated region
    $region17: #{_lambda_.2} parent=5 // pred_check
      %p125 = pneg %p124
    $region18: #{_lambda_.2} parent=5 // pred_check_branch
      %127 = sbr.rel (%p125) target = $region20
    $region19: #{_lambda_.2} parent=5 // pred_region
      // Predicated region
      $region21: #{_lambda_.2} parent=19 // pred_check
        %p128 = pneg %p42
      $region22: #{_lambda_.2} parent=19 // pred_check_branch
        %130 = sbr.rel (%p128) target = $region24
      $region23: #{_lambda_.2} parent=19 // pred_region
        %s131 = smul.u32 2, %s16
        %p132 = scmp.lt.s32.totalorder %s15, 1
        %s133 = scalar_select %p132, %s15, 1
        %p134 = scmp.lt.s32.totalorder %s131, 1
        %s135 = scalar_select %p134, %s131, 1
        %s136 = smul.addr %s133, 2
        %s137 = sadd.s32 %s135, %s136
        %s138 = smul.addr %s137, 2
        %s139 = scalar_lea.vmem %s0, %s138
        %s140 = smul.u32 2, %s16
      $region24: #{_lambda_.2} parent=19 // pred_fallthru
        _
    $region20: #{_lambda_.2} parent=5 // pred_fallthru
      _
    %p141 = scmp.le.s32.totalorder 1, %s8
    %p142 = scmp.lt.s32.totalorder %s8, 3
    %p143 = pnand %p141, %p142
    %p144 = pneg %p143
    // Predicated region
    $region25: #{_lambda_.2} parent=5 // pred_check
      _
    $region26: #{_lambda_.2} parent=5 // pred_check_branch
      %146 = sbr.rel (%p143) target = $region28
    $region27: #{_lambda_.2} parent=5 // pred_region
      %s147 = ssub.s32 %s8, 1
      %s148 = smul.u32 2, %s18
      %p149 = scmp.lt.s32.totalorder %s17, 1
      %s150 = scalar_select %p149, %s17, 1
      %p151 = scmp.lt.s32.totalorder %s148, 1
      %s152 = scalar_select %p151, %s148, 1
      %s153 = smul.addr %s150, 2
      %s154 = sadd.s32 %s152, %s153
      %s155 = smul.addr %s154, 2
      %s156 = scalar_lea.vmem %s0, %s155
      %p157 = pneg %p48
      %p158 = pneg %p45
      %s159 = smul.u32 32, %s18
      %p160 = scmp.lt.s32.totalorder %s159, 31
      %s161 = scalar_select %p160, %s159, 31
      %s162 = smul.addr %s161, 4
      %s163 = scalar_lea.vmem %s1, %s162
      %p164 = pneg %p74
      %p165 = pneg %p71
      %p166 = pneg %p100
      %p167 = pneg %p97
      %p168 = scmp.lt.s32.totalorder %s17, 1
      %s169 = scalar_select %p168, %s17, 1
      %s170 = smul.addr %s169, 4
      %s171 = scalar_lea.vmem %s2, %s170
      %s172 = smul.u32 2, %s18
      %p173 = scmp.lt.s32.totalorder %s17, 1
      %s174 = scalar_select %p173, %s17, 1
      %p175 = scmp.lt.s32.totalorder %s172, 1
      %s176 = scalar_select %p175, %s172, 1
      %s177 = smul.addr %s174, 2
      %s178 = sadd.s32 %s176, %s177
      %s179 = smul.addr %s178, 2
      %s180 = scalar_lea.vmem %s0, %s179
      %s181 = smul.u32 2, %s18
      %s182 = smul.u32 32, %s18
      %p183 = scmp.lt.s32.totalorder %s182, 31
      %s184 = scalar_select %p183, %s182, 31
      %s185 = smul.addr %s184, 4
      %s186 = scalar_lea.vmem %s1, %s185
      %s187 = smul.u32 32, %s18
      %p188 = scmp.lt.s32.totalorder %s17, 1
      %s189 = scalar_select %p188, %s17, 1
      %s190 = smul.addr %s189, 4
      %s191 = scalar_lea.vmem %s2, %s190
      %p192 = scmp.eq.s32.totalorder %s18, 0
      // Predicated region
      $region29: #{_lambda_.2} parent=27 // pred_check
        %p193 = pneg %p192
      $region30: #{_lambda_.2} parent=27 // pred_check_branch
        %195 = sbr.rel (%p193) target = $region32
      $region31: #{_lambda_.2} parent=27 // pred_region
        %vm196 = vcmask 404480
        %197 = vst.msk [vmem:[%s191] sm:$0xf] %vm196, 0.0
      $region32: #{_lambda_.2} parent=27 // pred_fallthru
        _
      %v198 = vld [vmem:[%s191] sm:$0xf]
      %v199 = vld [vmem:[%s180] sm:$0xf]
      %v200 = vld [vmem:[%s186] sm:$0xf]
      %v201 = vld [vmem:[%s186 + $0x4] sm:$0xf]
      %v202 = vld [vmem:[%s186 + $0x8] sm:$0xf]
      %v203 = vld [vmem:[%s186 + $0xc] sm:$0xf]
      %v204 = vld [vmem:[%s186 + $0x10] sm:$0xf]
      %v205 = vld [vmem:[%s186 + $0x14] sm:$0xf]
      %v206 = vld [vmem:[%s186 + $0x18] sm:$0xf]
      %v207 = vld [vmem:[%s186 + $0x1c] sm:$0xf]
      %v208 = vld [vmem:[%s186 + $0x20] sm:$0xf]
      %v209 = vld [vmem:[%s186 + $0x24] sm:$0xf]
      %v210 = vld [vmem:[%s186 + $0x28] sm:$0xf]
      %v211 = vld [vmem:[%s186 + $0x2c] sm:$0xf]
      %v212 = vld [vmem:[%s186 + $0x30] sm:$0xf]
      %v213 = vld [vmem:[%s186 + $0x34] sm:$0xf]
      %v214 = vld [vmem:[%s186 + $0x38] sm:$0xf]
      %v215 = vld [vmem:[%s186 + $0x3c] sm:$0xf]
      %v216 = vld [vmem:[%s186 + $0x40] sm:$0xf]
      %v217 = vld [vmem:[%s186 + $0x44] sm:$0xf]
      %v218 = vld [vmem:[%s186 + $0x48] sm:$0xf]
      %v219 = vld [vmem:[%s186 + $0x4c] sm:$0xf]
      %v220 = vld [vmem:[%s186 + $0x50] sm:$0xf]
      %v221 = vld [vmem:[%s186 + $0x54] sm:$0xf]
      %v222 = vld [vmem:[%s186 + $0x58] sm:$0xf]
      %v223 = vld [vmem:[%s186 + $0x5c] sm:$0xf]
      %v224 = vld [vmem:[%s186 + $0x60] sm:$0xf]
      %v225 = vld [vmem:[%s186 + $0x64] sm:$0xf]
      %v226 = vld [vmem:[%s186 + $0x68] sm:$0xf]
      %v227 = vld [vmem:[%s186 + $0x6c] sm:$0xf]
      %v228 = vld [vmem:[%s186 + $0x70] sm:$0xf]
      %v229 = vld [vmem:[%s186 + $0x74] sm:$0xf]
      %v230 = vld [vmem:[%s186 + $0x78] sm:$0xf]
      %v231 = vld [vmem:[%s186 + $0x7c] sm:$0xf]
      %233 = vst [vmem:[#allocation1] ss:$4 sm:$0xff] %v199
      %v234 = vld.sshfl [vmem:[#allocation1] sm:$0xff pattern:$0x73625140]
      %v235 = vld.sshfl [vmem:[#allocation1 + $0x8] sm:$0xff pattern:$0x73625140]
      %v270 = vunpack.c.l.b16 %v200
      %v271 = vunpack.c.l.b16 %v201
      %v272 = vunpack.c.l.b16 %v202
      %v273 = vunpack.c.l.b16 %v203
      %v274 = vunpack.c.l.b16 %v204
      %v275 = vunpack.c.l.b16 %v205
      %v276 = vunpack.c.l.b16 %v206
      %v277 = vunpack.c.l.b16 %v207
      %v278 = vunpack.c.l.b16 %v208
      %v279 = vunpack.c.l.b16 %v209
      %v280 = vunpack.c.l.b16 %v210
      %v281 = vunpack.c.l.b16 %v211
      %v282 = vunpack.c.l.b16 %v212
      %v283 = vunpack.c.l.b16 %v213
      %v284 = vunpack.c.l.b16 %v214
      %v285 = vunpack.c.l.b16 %v215
      %v286 = vunpack.c.l.b16 %v216
      %v287 = vunpack.c.l.b16 %v217
      %v288 = vunpack.c.l.b16 %v218
      %v289 = vunpack.c.l.b16 %v219
      %v290 = vunpack.c.l.b16 %v220
      %v291 = vunpack.c.l.b16 %v221
      %v292 = vunpack.c.l.b16 %v222
      %v293 = vunpack.c.l.b16 %v223
      %v294 = vunpack.c.l.b16 %v224
      %v295 = vunpack.c.l.b16 %v225
      %v296 = vunpack.c.l.b16 %v226
      %v297 = vunpack.c.l.b16 %v227
      %v298 = vunpack.c.l.b16 %v228
      %v299 = vunpack.c.l.b16 %v229
      %v300 = vunpack.c.l.b16 %v230
      %v301 = vunpack.c.l.b16 %v231
      %v302 = vpack.c.b16 %v271, %v270
      %v303 = vpack.c.b16 %v273, %v272
      %v304 = vpack.c.b16 %v275, %v274
      %v305 = vpack.c.b16 %v277, %v276
      %v306 = vpack.c.b16 %v279, %v278
      %v307 = vpack.c.b16 %v281, %v280
      %v308 = vpack.c.b16 %v283, %v282
      %v309 = vpack.c.b16 %v285, %v284
      %v310 = vpack.c.b16 %v287, %v286
      %v311 = vpack.c.b16 %v289, %v288
      %v312 = vpack.c.b16 %v291, %v290
      %v313 = vpack.c.b16 %v293, %v292
      %v314 = vpack.c.b16 %v295, %v294
      %v315 = vpack.c.b16 %v297, %v296
      %v316 = vpack.c.b16 %v299, %v298
      %v317 = vpack.c.b16 %v301, %v300
      %334 = vmatpush.bf16.msra.mxu0 %v309
      %335 = vmatpush.bf16.msra.mxu0 %v308
      %336 = vmatpush.bf16.msra.mxu0 %v307
      %337 = vmatpush.bf16.msra.mxu0 %v306
      %338 = vmatpush.bf16.msra.mxu0 %v305
      %339 = vmatpush.bf16.msra.mxu0 %v304
      %340 = vmatpush.bf16.msra.mxu0 %v303
      %341 = vmatpush.bf16.msra.mxu0 %v302
      %342 = vmatmul.bf16.gmra.mxu0 %v234
      %v343 = vpop.f32.mrf.mxu0
      %v344 = vadd.f32 0.0, %v343
      %v345 = vpop.f32.mrf.mxu0
      %346 = vdwg.mxu0
      %347 = vmatpush.bf16.msra.mxu0 %v317
      %348 = vmatpush.bf16.msra.mxu0 %v316
      %349 = vmatpush.bf16.msra.mxu0 %v315
      %350 = vmatpush.bf16.msra.mxu0 %v314
      %351 = vmatpush.bf16.msra.mxu0 %v313
      %352 = vmatpush.bf16.msra.mxu0 %v312
      %353 = vmatpush.bf16.msra.mxu0 %v311
      %354 = vmatpush.bf16.msra.mxu0 %v310
      %355 = vmatmul.bf16.gmra.mxu0 %v235
      %v356 = vpop.f32.mrf.mxu0
      %v357 = vadd.f32 %v344, %v356
      %v358 = vpop.f32.mrf.mxu0
      %359 = vdwg.mxu0
      %v360 = vadd.f32 %v198, %v357
      %vm361 = vcmask 404480
      %362 = vst.msk [vmem:[%s191] sm:$0xf] %vm361, %v360
      %p363 = scmp.lt.s32.totalorder %s17, 1
      %s364 = scalar_select %p363, %s17, 1
      %s365 = smul.addr %s364, 4
      %s366 = scalar_lea.vmem %s2, %s365
      // Predicated region
      $region33: #{_lambda_.2} parent=27 // pred_check
        %p367 = pneg %p97
      $region34: #{_lambda_.2} parent=27 // pred_check_branch
        %369 = sbr.rel (%p367) target = $region36
      $region35: #{_lambda_.2} parent=27 // pred_region
        _
      $region36: #{_lambda_.2} parent=27 // pred_fallthru
        _
    $region28: #{_lambda_.2} parent=5 // pred_fallthru
      _
    %p370 = scmp.le.s32.totalorder 2, %s8
    // Predicated region
    $region37: #{_lambda_.2} parent=5 // pred_check
      %p371 = pneg %p370
    $region38: #{_lambda_.2} parent=5 // pred_check_branch
      %373 = sbr.rel (%p371) target = $region40
    $region39: #{_lambda_.2} parent=5 // pred_region
      %s374 = ssub.s32 %s8, 2
      // Predicated region
      $region41: #{_lambda_.2} parent=39 // pred_check
        %p375 = pneg %p103
      $region42: #{_lambda_.2} parent=39 // pred_check_branch
        %377 = sbr.rel (%p375) target = $region44
      $region43: #{_lambda_.2} parent=39 // pred_region
        %p378 = scmp.lt.s32.totalorder %s19, 1
        %s379 = scalar_select %p378, %s19, 1
        %s380 = smul.addr %s379, 4
        %s381 = scalar_lea.vmem %s2, %s380
      $region44: #{_lambda_.2} parent=39 // pred_fallthru
        _
    $region40: #{_lambda_.2} parent=5 // pred_fallthru
      _
  $region6: #{_lambda_.2} parent=0 // loop_footer
    %s12 = sadd.s32 1, %s8
  $region7: #{_lambda_.2} parent=0 // loop_footer_branch
    %7 = sbr.rel target = $region3
  $region8: #{_lambda_.2} parent=0 // loop_exit
    _

// kernel: _lambda_.3
$region0: #{_lambda_.3}
  #allocation0 [shape = 'u32[]', space=smem, size = 0x4, offset = 0x4, fixed_abs, tag = 'smem constant byte address 0x4 - core index']
  #allocation1 [shape = 'u32[72,128]{1,0:T(1,128)}', space=vmem, size = 0x9000, scoped, tag = 'internal scratch']
  %s0 = inlined_call_operand.vmem [shape: bf16[2,4,256], index: 0, kind: input, shape index: {}]
  %s1 = inlined_call_operand.vmem [shape: f32[50,256], index: 1, kind: input, shape index: {}]
  %s2 = inlined_call_operand.vmem [shape: f32[2,32,50], index: 2, kind: input, shape index: {}]
  %s3 = inlined_call_operand.vmem [shape: bf16[32,4], index: 3, kind: input, shape index: {}]
  %s4 = inlined_call_operand.vmem [shape: f32[32,1], index: 4, kind: input, shape index: {}]
  %s5 = inlined_call_operand.vmem [shape: f32[32,1], index: 5, kind: input, shape index: {}]
  %s6 = inlined_call_operand.vmem [shape: f32[2,32,256], index: 6, kind: output, shape index: {}]
  %s7 = sld [smem:[#allocation0]]
  $region65: #{_lambda_.3} parent=0
    _
  %s9 = ssub.s32 1, %s7
  %s10 = scalar_select 0, %s9, %s7
  loop: start=0, step=1, limit=4
  $region2: #{_lambda_.3} parent=0 // loop_pre_header
    _
  $region3: #{_lambda_.3} parent=0 // loop_header
    %s12 = sphi 0, %s16
    %p13 = scmp.ge.s32.totalorder %s12, 4
    %s19 = sphi 0, %s38
    %s20 = sphi 0, %s34
    %s21 = sphi 0, %s30
    %s22 = sphi 0, %s19
    %s23 = sphi 0, %s20
    %s24 = sphi 0, %s21
    %s25 = sphi 0, %s22
    %s26 = sphi 0, %s23
    %s27 = sphi 0, %s24
    %s45 = sphi 0, %s47
    %s48 = sphi 0, %s45
    %s49 = sphi 0, %s48
    %s65 = sphi 0, %s49
    %s71 = sphi 0, %s73
    %s74 = sphi 0, %s71
    %s75 = sphi 0, %s74
    %s91 = sphi 0, %s75
    %s97 = sphi 0, %s99
    %s100 = sphi 0, %s97
    %s101 = sphi 0, %s100
    %s117 = sphi 0, %s101
    %s121 = sphi 0, %s121
    %s123 = sphi 0, %s121
    %s124 = sphi 0, %s123
    %s138 = sphi 0, %s124
    %s142 = sphi 0, %s142
    %s144 = sphi 0, %s142
    %s145 = sphi 0, %s144
    %s159 = sphi 0, %s145
    %s163 = sphi 0, %s163
    %s165 = sphi 0, %s163
    %s166 = sphi 0, %s165
    %s180 = sphi 0, %s166
    %s188 = sphi 0, %s190
    %s191 = sphi 0, %s188
    %s192 = sphi 0, %s191
    %s208 = sphi 0, %s192
  $region4: #{_lambda_.3} parent=0 // loop_header_branch
    %15 = sbr.rel (%p13) target = $region8
  $region5: #{_lambda_.3} parent=0 // loop_body
    %s17 = ssub.s32 %s12, 1
    %s18 = ssub.s32 %s12, 2
    %s28 = sadd.s32 1, %s21
    %p29 = scmp.ge.s32.totalorder %s28, 1
    %s30 = scalar_select %p29, 0, %s28
    %s31 = sadd.s32 1, %s20
    %s32 = scalar_select %p29, %s31, %s20
    %p33 = scmp.ge.s32.totalorder %s32, 1
    %s34 = scalar_select %p33, 0, %s32
    %s35 = sadd.s32 1, %s19
    %s36 = scalar_select %p33, %s35, %s19
    %p37 = scmp.ge.s32.totalorder %s36, 2
    %s38 = scalar_select %p37, 0, %s36
    %s39 = ssub.s32 %s19, %s38
    %s40 = ssub.s32 %s21, %s30
    %s41 = sor.u32 %s39, %s40
    %s42 = ssub.s32 %s20, %s34
    %s43 = sor.u32 %s41, %s42
    %p44 = scmp.eq.s32.totalorder %s43, 0
    %s46 = sadd.s32 %s45, 1
    %s47 = scalar_select %p44, %s45, %s46
    %p50 = pneg %p44
    %p51 = scmp.eq.s32.totalorder %s12, 1
    %p52 = por %p50, %p51
    %p53 = scmp.ne.s32.totalorder %s45, %s48
    %p54 = scmp.eq.s32.totalorder %s12, 0
    %p55 = por %p53, %p54
    %p56 = scmp.ne.s32.totalorder %s45, %s48
    %p57 = scmp.eq.s32.totalorder %s17, 1
    %p58 = por %p56, %p57
    %p59 = scmp.ne.s32.totalorder %s48, %s49
    %p60 = scmp.eq.s32.totalorder %s17, 0
    %p61 = por %p59, %p60
    %p62 = scmp.ne.s32.totalorder %s48, %s49
    %p63 = scmp.eq.s32.totalorder %s18, 1
    %p64 = por %p62, %p63
    %p66 = scmp.ne.s32.totalorder %s49, %s65
    %p67 = scmp.eq.s32.totalorder %s18, 0
    %p68 = por %p66, %p67
    %s69 = ssub.s32 %s20, %s34
    %p70 = scmp.eq.s32.totalorder %s69, 0
    %s72 = sadd.s32 %s71, 1
    %s73 = scalar_select %p70, %s71, %s72
    %p76 = pneg %p70
    %p77 = scmp.eq.s32.totalorder %s12, 1
    %p78 = por %p76, %p77
    %p79 = scmp.ne.s32.totalorder %s71, %s74
    %p80 = scmp.eq.s32.totalorder %s12, 0
    %p81 = por %p79, %p80
    %p82 = scmp.ne.s32.totalorder %s71, %s74
    %p83 = scmp.eq.s32.totalorder %s17, 1
    %p84 = por %p82, %p83
    %p85 = scmp.ne.s32.totalorder %s74, %s75
    %p86 = scmp.eq.s32.totalorder %s17, 0
    %p87 = por %p85, %p86
    %p88 = scmp.ne.s32.totalorder %s74, %s75
    %p89 = scmp.eq.s32.totalorder %s18, 1
    %p90 = por %p88, %p89
    %p92 = scmp.ne.s32.totalorder %s75, %s91
    %p93 = scmp.eq.s32.totalorder %s18, 0
    %p94 = por %p92, %p93
    %s95 = ssub.s32 %s19, %s38
    %p96 = scmp.eq.s32.totalorder %s95, 0
    %s98 = sadd.s32 %s97, 1
    %s99 = scalar_select %p96, %s97, %s98
    %p102 = pneg %p96
    %p103 = scmp.eq.s32.totalorder %s12, 1
    %p104 = por %p102, %p103
    %p105 = scmp.ne.s32.totalorder %s97, %s100
    %p106 = scmp.eq.s32.totalorder %s12, 0
    %p107 = por %p105, %p106
    %p108 = scmp.ne.s32.totalorder %s97, %s100
    %p109 = scmp.eq.s32.totalorder %s17, 1
    %p110 = por %p108, %p109
    %p111 = scmp.ne.s32.totalorder %s100, %s101
    %p112 = scmp.eq.s32.totalorder %s17, 0
    %p113 = por %p111, %p112
    %p114 = scmp.ne.s32.totalorder %s100, %s101
    %p115 = scmp.eq.s32.totalorder %s18, 1
    %p116 = por %p114, %p115
    %p118 = scmp.ne.s32.totalorder %s101, %s117
    %p119 = scmp.eq.s32.totalorder %s18, 0
    %p120 = por %p118, %p119
    %s122 = sadd.s32 %s121, 1
    %p125 = scmp.eq.s32.totalorder %s12, 1
    %p126 = scmp.ne.s32.totalorder %s121, %s123
    %p127 = scmp.eq.s32.totalorder %s12, 0
    %p128 = por %p126, %p127
    %p129 = scmp.ne.s32.totalorder %s121, %s123
    %p130 = scmp.eq.s32.totalorder %s17, 1
    %p131 = por %p129, %p130
    %p132 = scmp.ne.s32.totalorder %s123, %s124
    %p133 = scmp.eq.s32.totalorder %s17, 0
    %p134 = por %p132, %p133
    %p135 = scmp.ne.s32.totalorder %s123, %s124
    %p136 = scmp.eq.s32.totalorder %s18, 1
    %p137 = por %p135, %p136
    %p139 = scmp.ne.s32.totalorder %s124, %s138
    %p140 = scmp.eq.s32.totalorder %s18, 0
    %p141 = por %p139, %p140
    %s143 = sadd.s32 %s142, 1
    %p146 = scmp.eq.s32.totalorder %s12, 1
    %p147 = scmp.ne.s32.totalorder %s142, %s144
    %p148 = scmp.eq.s32.totalorder %s12, 0
    %p149 = por %p147, %p148
    %p150 = scmp.ne.s32.totalorder %s142, %s144
    %p151 = scmp.eq.s32.totalorder %s17, 1
    %p152 = por %p150, %p151
    %p153 = scmp.ne.s32.totalorder %s144, %s145
    %p154 = scmp.eq.s32.totalorder %s17, 0
    %p155 = por %p153, %p154
    %p156 = scmp.ne.s32.totalorder %s144, %s145
    %p157 = scmp.eq.s32.totalorder %s18, 1
    %p158 = por %p156, %p157
    %p160 = scmp.ne.s32.totalorder %s145, %s159
    %p161 = scmp.eq.s32.totalorder %s18, 0
    %p162 = por %p160, %p161
    %s164 = sadd.s32 %s163, 1
    %p167 = scmp.eq.s32.totalorder %s12, 1
    %p168 = scmp.ne.s32.totalorder %s163, %s165
    %p169 = scmp.eq.s32.totalorder %s12, 0
    %p170 = por %p168, %p169
    %p171 = scmp.ne.s32.totalorder %s163, %s165
    %p172 = scmp.eq.s32.totalorder %s17, 1
    %p173 = por %p171, %p172
    %p174 = scmp.ne.s32.totalorder %s165, %s166
    %p175 = scmp.eq.s32.totalorder %s17, 0
    %p176 = por %p174, %p175
    %p177 = scmp.ne.s32.totalorder %s165, %s166
    %p178 = scmp.eq.s32.totalorder %s18, 1
    %p179 = por %p177, %p178
    %p181 = scmp.ne.s32.totalorder %s166, %s180
    %p182 = scmp.eq.s32.totalorder %s18, 0
    %p183 = por %p181, %p182
    %s184 = ssub.s32 %s19, %s38
    %s185 = ssub.s32 %s20, %s34
    %s186 = sor.u32 %s184, %s185
    %p187 = scmp.eq.s32.totalorder %s186, 0
    %s189 = sadd.s32 %s188, 1
    %s190 = scalar_select %p187, %s188, %s189
    %p193 = pneg %p187
    %p194 = scmp.eq.s32.totalorder %s12, 1
    %p195 = por %p193, %p194
    %p196 = scmp.ne.s32.totalorder %s188, %s191
    %p197 = scmp.eq.s32.totalorder %s12, 0
    %p198 = por %p196, %p197
    %p199 = scmp.ne.s32.totalorder %s188, %s191
    %p200 = scmp.eq.s32.totalorder %s17, 1
    %p201 = por %p199, %p200
    %p202 = scmp.ne.s32.totalorder %s191, %s192
    %p203 = scmp.eq.s32.totalorder %s17, 0
    %p204 = por %p202, %p203
    %p205 = scmp.ne.s32.totalorder %s191, %s192
    %p206 = scmp.eq.s32.totalorder %s18, 1
    %p207 = por %p205, %p206
    %p209 = scmp.ne.s32.totalorder %s192, %s208
    %p210 = scmp.eq.s32.totalorder %s18, 0
    %p211 = por %p209, %p210
    %p212 = scmp.le.s32.totalorder 1, %s12
    %p213 = scmp.lt.s32.totalorder %s12, 3
    %p214 = pnand %p212, %p213
    %p215 = pneg %p214
    // Predicated region
    $region9: #{_lambda_.3} parent=5 // pred_check
      _
    $region10: #{_lambda_.3} parent=5 // pred_check_branch
      %217 = sbr.rel (%p214) target = $region12
    $region11: #{_lambda_.3} parent=5 // pred_region
      %s218 = ssub.s32 %s12, 1
      // Predicated region
      $region13: #{_lambda_.3} parent=11 // pred_check
        %p219 = pneg %p87
      $region14: #{_lambda_.3} parent=11 // pred_check_branch
        %221 = sbr.rel (%p219) target = $region16
      $region15: #{_lambda_.3} parent=11 // pred_region
        %s222 = smul.u32 2, %s23
        %p223 = scmp.lt.s32.totalorder %s222, 1
        %s224 = scalar_select %p223, %s222, 1
        %s225 = smul.addr %s224, 8
        %s226 = scalar_lea.vmem %s1, %s225
        %s227 = smul.u32 2, %s23
      $region16: #{_lambda_.3} parent=11 // pred_fallthru
        _
      // Predicated region
      $region17: #{_lambda_.3} parent=11 // pred_check
        %p228 = pneg %p134
      $region18: #{_lambda_.3} parent=11 // pred_check_branch
        %230 = sbr.rel (%p228) target = $region20
      $region19: #{_lambda_.3} parent=11 // pred_region
        _
      $region20: #{_lambda_.3} parent=11 // pred_fallthru
        _
      // Predicated region
      $region21: #{_lambda_.3} parent=11 // pred_check
        %p231 = pneg %p155
      $region22: #{_lambda_.3} parent=11 // pred_check_branch
        %233 = sbr.rel (%p231) target = $region24
      $region23: #{_lambda_.3} parent=11 // pred_region
        _
      $region24: #{_lambda_.3} parent=11 // pred_fallthru
        _
      // Predicated region
      $region25: #{_lambda_.3} parent=11 // pred_check
        %p234 = pneg %p176
      $region26: #{_lambda_.3} parent=11 // pred_check_branch
        %236 = sbr.rel (%p234) target = $region28
      $region27: #{_lambda_.3} parent=11 // pred_region
        _
      $region28: #{_lambda_.3} parent=11 // pred_fallthru
        _
    $region12: #{_lambda_.3} parent=5 // pred_fallthru
      _
    %p237 = scmp.lt.s32.totalorder %s12, 2
    // Predicated region
    $region29: #{_lambda_.3} parent=5 // pred_check
      %p238 = pneg %p237
    $region30: #{_lambda_.3} parent=5 // pred_check_branch
      %240 = sbr.rel (%p238) target = $region32
    $region31: #{_lambda_.3} parent=5 // pred_region
      // Predicated region
      $region33: #{_lambda_.3} parent=31 // pred_check
        %p241 = pneg %p55
      $region34: #{_lambda_.3} parent=31 // pred_check_branch
        %243 = sbr.rel (%p241) target = $region36
      $region35: #{_lambda_.3} parent=31 // pred_region
        %s244 = smul.u32 2, %s20
        %p245 = scmp.lt.s32.totalorder %s19, 1
        %s246 = scalar_select %p245, %s19, 1
        %p247 = scmp.lt.s32.totalorder %s21, 0
        %s248 = scalar_select %p247, %s21, 0
        %p249 = scmp.lt.s32.totalorder %s244, 1
        %s250 = scalar_select %p249, %s244, 1
        %s251 = smul.addr %s248, 2
        %s252 = sadd.s32 %s250, %s251
        %s253 = smul.addr %s246, 2
        %s254 = sadd.s32 %s252, %s253
        %s255 = smul.addr %s254, 2
        %s256 = scalar_lea.vmem %s0, %s255
        %s257 = smul.u32 2, %s20
      $region36: #{_lambda_.3} parent=31 // pred_fallthru
        _
      // Predicated region
      $region37: #{_lambda_.3} parent=31 // pred_check
        %p258 = pneg %p107
      $region38: #{_lambda_.3} parent=31 // pred_check_branch
        %260 = sbr.rel (%p258) target = $region40
      $region39: #{_lambda_.3} parent=31 // pred_region
        %p261 = scmp.lt.s32.totalorder %s19, 1
        %s262 = scalar_select %p261, %s19, 1
        %s263 = smul.addr %s262, 4
        %s264 = smul.addr %s263, 8
        %s265 = scalar_lea.vmem %s2, %s264
      $region40: #{_lambda_.3} parent=31 // pred_fallthru
        _
    $region32: #{_lambda_.3} parent=5 // pred_fallthru
      _
    %p266 = scmp.le.s32.totalorder 1, %s12
    %p267 = scmp.lt.s32.totalorder %s12, 3
    %p268 = pnand %p266, %p267
    %p269 = pneg %p268
    // Predicated region
    $region41: #{_lambda_.3} parent=5 // pred_check
      _
    $region42: #{_lambda_.3} parent=5 // pred_check_branch
      %271 = sbr.rel (%p268) target = $region44
    $region43: #{_lambda_.3} parent=5 // pred_region
      %s272 = ssub.s32 %s12, 1
      %s273 = smul.u32 2, %s23
      %p274 = scmp.lt.s32.totalorder %s22, 1
      %s275 = scalar_select %p274, %s22, 1
      %p276 = scmp.lt.s32.totalorder %s24, 0
      %s277 = scalar_select %p276, %s24, 0
      %p278 = scmp.lt.s32.totalorder %s273, 1
      %s279 = scalar_select %p278, %s273, 1
      %s280 = smul.addr %s277, 2
      %s281 = sadd.s32 %s279, %s280
      %s282 = smul.addr %s275, 2
      %s283 = sadd.s32 %s281, %s282
      %s284 = smul.addr %s283, 2
      %s285 = scalar_lea.vmem %s0, %s284
      %p286 = pneg %p61
      %p287 = pneg %p58
      %s288 = smul.u32 2, %s23
      %p289 = scmp.lt.s32.totalorder %s288, 1
      %s290 = scalar_select %p289, %s288, 1
      %s291 = smul.addr %s290, 8
      %s292 = scalar_lea.vmem %s1, %s291
      %p293 = pneg %p87
      %p294 = pneg %p84
      %p295 = scmp.lt.s32.totalorder %s22, 1
      %s296 = scalar_select %p295, %s22, 1
      %s297 = smul.addr %s296, 4
      %s298 = smul.addr %s297, 8
      %s299 = scalar_lea.vmem %s2, %s298
      %p300 = pneg %p113
      %p301 = pneg %p110
      %p302 = pneg %p134
      %p303 = pneg %p131
      %p304 = pneg %p155
      %p305 = pneg %p152
      %p306 = pneg %p176
      %p307 = pneg %p173
      %p308 = pneg %p204
      %p309 = pneg %p201
      %s310 = smul.u32 2, %s23
      %p311 = scmp.lt.s32.totalorder %s22, 1
      %s312 = scalar_select %p311, %s22, 1
      %p313 = scmp.lt.s32.totalorder %s310, 1
      %s314 = scalar_select %p313, %s310, 1
      %s315 = smul.addr %s312, 8
      %s316 = sadd.s32 %s314, %s315
      %s317 = smul.addr %s316, 8
      %s318 = scalar_lea.vmem %s6, %s317
      %s319 = smul.u32 2, %s23
      %p320 = scmp.lt.s32.totalorder %s22, 1
      %s321 = scalar_select %p320, %s22, 1
      %p322 = scmp.lt.s32.totalorder %s24, 0
      %s323 = scalar_select %p322, %s24, 0
      %p324 = scmp.lt.s32.totalorder %s319, 1
      %s325 = scalar_select %p324, %s319, 1
      %s326 = smul.addr %s323, 2
      %s327 = sadd.s32 %s325, %s326
      %s328 = smul.addr %s321, 2
      %s329 = sadd.s32 %s327, %s328
      %s330 = smul.addr %s329, 2
      %s331 = scalar_lea.vmem %s0, %s330
      %s332 = smul.u32 2, %s23
      %s333 = smul.u32 2, %s23
      %p334 = scmp.lt.s32.totalorder %s333, 1
      %s335 = scalar_select %p334, %s333, 1
      %s336 = smul.addr %s335, 8
      %s337 = scalar_lea.vmem %s1, %s336
      %s338 = smul.u32 2, %s23
      %p339 = scmp.lt.s32.totalorder %s22, 1
      %s340 = scalar_select %p339, %s22, 1
      %s341 = smul.addr %s340, 4
      %s342 = smul.addr %s341, 8
      %s343 = scalar_lea.vmem %s2, %s342
      %s344 = smul.u32 2, %s23
      %p345 = scmp.lt.s32.totalorder %s22, 1
      %s346 = scalar_select %p345, %s22, 1
      %p347 = scmp.lt.s32.totalorder %s344, 1
      %s348 = scalar_select %p347, %s344, 1
      %s349 = smul.addr %s346, 8
      %s350 = sadd.s32 %s348, %s349
      %s351 = smul.addr %s350, 8
      %s352 = scalar_lea.vmem %s6, %s351
      %s353 = smul.u32 2, %s23
      %p355 = scmp.eq.s32.totalorder %s24, 0
      // Predicated region
      $region45: #{_lambda_.3} parent=43 // pred_check
        %p356 = pneg %p355
      $region46: #{_lambda_.3} parent=43 // pred_check_branch
        %358 = sbr.rel (%p356) target = $region48
      $region47: #{_lambda_.3} parent=43 // pred_region
        %v359 = vld [vmem:[%s343] sm:$0xff]
        %v360 = vld [vmem:[%s343 + $0x8] sm:$0xff]
        %v361 = vld [vmem:[%s343 + $0x10] sm:$0xff]
        %v362 = vld [vmem:[%s343 + $0x18] sm:$0xff]
        %v363 = vld [vmem:[%s337] sm:$0xff]
        %v364 = vld [vmem:[%s337 + $0x8] sm:$0xff]
        %v365 = vld [vmem:[%s337 + $0x10] sm:$0xff]
        %v366 = vld [vmem:[%s337 + $0x18] sm:$0xff]
        %v367 = vld [vmem:[%s337 + $0x20] sm:$0xff]
        %v368 = vld [vmem:[%s337 + $0x28] sm:$0xff]
        %v369 = vld [vmem:[%s337 + $0x30] sm:$0xff]
        %v370 = vld [vmem:[%s337 + $0x38] sm:$0xff]
        %v371 = vld [vmem:[%s337 + $0x40] sm:$0xff]
        %v372 = vld [vmem:[%s337 + $0x48] sm:$0xff]
        %v373 = vld [vmem:[%s337 + $0x50] sm:$0xff]
        %v374 = vld [vmem:[%s337 + $0x58] sm:$0xff]
        %v375 = vld [vmem:[%s337 + $0x60] sm:$0x3]
        %v376 = vld [vmem:[%s337 + $0x68] sm:$0x3]
        %vm377 = vcmask 408576
        %v379 = vsel %vm377, %v359, 0
        %v382 = vsel %vm377, %v360, 0
        %v385 = vsel %vm377, %v361, 0
        %v388 = vsel %vm377, %v362, 0
        %vm390 = vcmask 1041408
        %v392 = vsel %vm390, %v375, 0
        %v395 = vsel %vm390, %v376, 0
        %397 = vmatpush.msra.mxu0 0.0
        %398 = vmatpush.msra.mxu0 0.0
        %399 = vmatpush.msra.mxu0 0.0
        %400 = vmatpush.msra.mxu0 0.0
        %401 = vmatpush.msra.mxu0 0.0
        %402 = vmatpush.msra.mxu0 0.0
        %403 = vmatpush.msra.mxu0 0.0
        %404 = vmatpush.msra.mxu0 0.0
        %405 = vmatpush.msra.mxu0 0.0
        %406 = vmatpush.msra.mxu0 %v392
        %407 = vmatpush.msra.mxu0 %v373
        %408 = vmatpush.msra.mxu0 %v371
        %409 = vmatpush.msra.mxu0 %v369
        %410 = vmatpush.msra.mxu0 %v367
        %411 = vmatpush.msra.mxu0 %v365
        %412 = vmatpush.msra.mxu0 %v363
        %413 = vmatmul.f32.gmra.mxu0 %v379
        %v414 = vpop.f32.mrf.mxu0
        %v415 = vadd.f32 0.0, %v414
        %416 = vmatmul.f32.gmra.mxu0 %v382
        %v417 = vpop.f32.mrf.mxu0
        %v418 = vadd.f32 0.0, %v417
        %419 = vmatmul.f32.gmra.mxu0 %v385
        %v420 = vpop.f32.mrf.mxu0
        %v421 = vadd.f32 0.0, %v420
        %422 = vmatmul.f32.gmra.mxu0 %v388
        %v423 = vpop.f32.mrf.mxu0
        %v424 = vadd.f32 0.0, %v423
        %425 = vdwg.mxu0
        %426 = vmatpush.msra.mxu0 0.0
        %427 = vmatpush.msra.mxu0 0.0
        %428 = vmatpush.msra.mxu0 0.0
        %429 = vmatpush.msra.mxu0 0.0
        %430 = vmatpush.msra.mxu0 0.0
        %431 = vmatpush.msra.mxu0 0.0
        %432 = vmatpush.msra.mxu0 0.0
        %433 = vmatpush.msra.mxu0 0.0
        %434 = vmatpush.msra.mxu0 0.0
        %435 = vmatpush.msra.mxu0 %v395
        %436 = vmatpush.msra.mxu0 %v374
        %437 = vmatpush.msra.mxu0 %v372
        %438 = vmatpush.msra.mxu0 %v370
        %439 = vmatpush.msra.mxu0 %v368
        %440 = vmatpush.msra.mxu0 %v366
        %441 = vmatpush.msra.mxu0 %v364
        %442 = vmatmul.f32.gmra.mxu0 %v379
        %v443 = vpop.f32.mrf.mxu0
        %v444 = vadd.f32 0.0, %v443
        %445 = vmatmul.f32.gmra.mxu0 %v382
        %v446 = vpop.f32.mrf.mxu0
        %v447 = vadd.f32 0.0, %v446
        %448 = vmatmul.f32.gmra.mxu0 %v385
        %v449 = vpop.f32.mrf.mxu0
        %v450 = vadd.f32 0.0, %v449
        %451 = vmatmul.f32.gmra.mxu0 %v388
        %v452 = vpop.f32.mrf.mxu0
        %v453 = vadd.f32 0.0, %v452
        %454 = vdwg.mxu0
        %455 = vst [vmem:[%s352] sm:$0xff] %v415
        %456 = vst [vmem:[%s352 + $0x8] sm:$0xff] %v444
        %457 = vst [vmem:[%s352 + $0x10] sm:$0xff] %v418
        %458 = vst [vmem:[%s352 + $0x18] sm:$0xff] %v447
        %459 = vst [vmem:[%s352 + $0x20] sm:$0xff] %v421
        %460 = vst [vmem:[%s352 + $0x28] sm:$0xff] %v450
        %461 = vst [vmem:[%s352 + $0x30] sm:$0xff] %v424
        %462 = vst [vmem:[%s352 + $0x38] sm:$0xff] %v453
      $region48: #{_lambda_.3} parent=43 // pred_fallthru
        _
      %v463 = vld [vmem:[%s3] sm:$0xf]
      %v464 = vld [vmem:[%s3 + $0x4] sm:$0xf]
      %v465 = vld [vmem:[%s3 + $0x8] sm:$0xf]
      %v466 = vld [vmem:[%s3 + $0xc] sm:$0xf]
      %v467 = vld [vmem:[%s352] sm:$0xff]
      %v468 = vld [vmem:[%s352 + $0x8] sm:$0xff]
      %v469 = vld [vmem:[%s352 + $0x10] sm:$0xff]
      %v470 = vld [vmem:[%s352 + $0x18] sm:$0xff]
      %v471 = vld [vmem:[%s352 + $0x20] sm:$0xff]
      %v472 = vld [vmem:[%s352 + $0x28] sm:$0xff]
      %v473 = vld [vmem:[%s352 + $0x30] sm:$0xff]
      %v474 = vld [vmem:[%s352 + $0x38] sm:$0xff]
      %v475 = vld [vmem:[%s331] sm:$0xf]
      %v480 = vunpack.c.l.b16 %v463
      %v481 = vunpack.c.l.b16 %v464
      %v482 = vunpack.c.l.b16 %v465
      %v483 = vunpack.c.l.b16 %v466
      %v484 = vpack.c.b16 %v481, %v480
      %v485 = vpack.c.b16 %v483, %v482
      %487 = vst [vmem:[#allocation1] ss:$4 sm:$0xff] %v475
      %v488 = vld.sshfl [vmem:[#allocation1] sm:$0xff pattern:$0x73625140]
      %v489 = vld.sshfl [vmem:[#allocation1 + $0x8] sm:$0xff pattern:$0x73625140]
      %vm490 = vcmask 31744
      %v492 = vsel %vm490, %v484, 0
      %v495 = vsel %vm490, %v485, 0
      %vm497 = vcmask 1041408
      %v498 = vsel %vm497, %v488, 0
      %v500 = vsel %vm497, %v489, 0
      %502 = vmatpush.bf16.msra.mxu0 0
      %503 = vmatpush.bf16.msra.mxu0 0
      %504 = vmatpush.bf16.msra.mxu0 0
      %505 = vmatpush.bf16.msra.mxu0 0
      %506 = vmatpush.bf16.msra.mxu0 0
      %507 = vmatpush.bf16.msra.mxu0 0
      %508 = vmatpush.bf16.msra.mxu0 0
      %509 = vmatpush.bf16.msra.mxu0 %v498
      %510 = vmatmul.bf16.gmra.mxu0 %v492
      %v511 = vpop.f32.mrf.mxu0
      %v512 = vadd.f32 0.0, %v511
      %v513 = vpop.f32.mrf.mxu0
      %v514 = vadd.f32 0.0, %v513
      %515 = vmatmul.bf16.gmra.mxu0 %v495
      %v516 = vpop.f32.mrf.mxu0
      %v517 = vadd.f32 0.0, %v516
      %v518 = vpop.f32.mrf.mxu0
      %v519 = vadd.f32 0.0, %v518
      %520 = vdwg.mxu0
      %521 = vmatpush.bf16.msra.mxu0 0
      %522 = vmatpush.bf16.msra.mxu0 0
      %523 = vmatpush.bf16.msra.mxu0 0
      %524 = vmatpush.bf16.msra.mxu0 0
      %525 = vmatpush.bf16.msra.mxu0 0
      %526 = vmatpush.bf16.msra.mxu0 0
      %527 = vmatpush.bf16.msra.mxu0 0
      %528 = vmatpush.bf16.msra.mxu0 %v500
      %529 = vmatmul.bf16.gmra.mxu0 %v492
      %v530 = vpop.f32.mrf.mxu0
      %v531 = vadd.f32 0.0, %v530
      %v532 = vpop.f32.mrf.mxu0
      %v533 = vadd.f32 0.0, %v532
      %534 = vmatmul.bf16.gmra.mxu0 %v495
      %v535 = vpop.f32.mrf.mxu0
      %v536 = vadd.f32 0.0, %v535
      %v537 = vpop.f32.mrf.mxu0
      %v538 = vadd.f32 0.0, %v537
      %539 = vdwg.mxu0
      %v540 = vadd.f32 %v467, %v512
      %v541 = vadd.f32 %v468, %v531
      %v542 = vadd.f32 %v469, %v514
      %v543 = vadd.f32 %v470, %v533
      %v544 = vadd.f32 %v471, %v517
      %v545 = vadd.f32 %v472, %v536
      %v546 = vadd.f32 %v473, %v519
      %v547 = vadd.f32 %v474, %v538
      %548 = vst [vmem:[%s352] sm:$0xff] %v540
      %549 = vst [vmem:[%s352 + $0x8] sm:$0xff] %v541
      %550 = vst [vmem:[%s352 + $0x10] sm:$0xff] %v542
      %551 = vst [vmem:[%s352 + $0x18] sm:$0xff] %v543
      %552 = vst [vmem:[%s352 + $0x20] sm:$0xff] %v544
      %553 = vst [vmem:[%s352 + $0x28] sm:$0xff] %v545
      %554 = vst [vmem:[%s352 + $0x30] sm:$0xff] %v546
      %555 = vst [vmem:[%s352 + $0x38] sm:$0xff] %v547
      // Predicated region
      $region49: #{_lambda_.3} parent=43 // pred_check
        %p556 = pneg %p355
      $region50: #{_lambda_.3} parent=43 // pred_check_branch
        %558 = sbr.rel (%p556) target = $region52
      $region51: #{_lambda_.3} parent=43 // pred_region
        %v559 = vld [vmem:[%s352] sm:$0xff]
        %v560 = vld [vmem:[%s352 + $0x8] sm:$0xff]
        %v561 = vld [vmem:[%s352 + $0x10] sm:$0xff]
        %v562 = vld [vmem:[%s352 + $0x18] sm:$0xff]
        %v563 = vld [vmem:[%s352 + $0x20] sm:$0xff]
        %v564 = vld [vmem:[%s352 + $0x28] sm:$0xff]
        %v565 = vld [vmem:[%s352 + $0x30] sm:$0xff]
        %v566 = vld [vmem:[%s352 + $0x38] sm:$0xff]
        %v567 = vld [vmem:[%s4] sm:$0xff]
        %v568 = vld [vmem:[%s4 + $0x8] sm:$0xff]
        %v569 = vld [vmem:[%s4 + $0x10] sm:$0xff]
        %v570 = vld [vmem:[%s4 + $0x18] sm:$0xff]
        %572 = vset.pattern.permute.xlu0 0
        %573 = vperm.xlu0 %572, %v567
        %v574 = vpop.permute.xlu0 %573
        %577 = vset.pattern.permute.xlu0 0
        %578 = vperm.xlu0 %577, %v568
        %v579 = vpop.permute.xlu0 %578
        %582 = vset.pattern.permute.xlu0 0
        %583 = vperm.xlu0 %582, %v569
        %v584 = vpop.permute.xlu0 %583
        %587 = vset.pattern.permute.xlu0 0
        %588 = vperm.xlu0 %587, %v570
        %v589 = vpop.permute.xlu0 %588
        %v591 = vmul.f32 %v559, %v574
        %v592 = vmul.f32 %v560, %v574
        %v593 = vmul.f32 %v561, %v579
        %v594 = vmul.f32 %v562, %v579
        %v595 = vmul.f32 %v563, %v584
        %v596 = vmul.f32 %v564, %v584
        %v597 = vmul.f32 %v565, %v589
        %v598 = vmul.f32 %v566, %v589
        %v599 = vld [vmem:[%s5] sm:$0xff]
        %v600 = vld [vmem:[%s5 + $0x8] sm:$0xff]
        %v601 = vld [vmem:[%s5 + $0x10] sm:$0xff]
        %v602 = vld [vmem:[%s5 + $0x18] sm:$0xff]
        %604 = vset.pattern.permute.xlu0 0
        %605 = vperm.xlu0 %604, %v599
        %v606 = vpop.permute.xlu0 %605
        %609 = vset.pattern.permute.xlu0 0
        %610 = vperm.xlu0 %609, %v600
        %v611 = vpop.permute.xlu0 %610
        %614 = vset.pattern.permute.xlu0 0
        %615 = vperm.xlu0 %614, %v601
        %v616 = vpop.permute.xlu0 %615
        %619 = vset.pattern.permute.xlu0 0
        %620 = vperm.xlu0 %619, %v602
        %v621 = vpop.permute.xlu0 %620
        %v623 = vadd.f32 %v591, %v606
        %v624 = vadd.f32 %v592, %v606
        %v625 = vadd.f32 %v593, %v611
        %v626 = vadd.f32 %v594, %v611
        %v627 = vadd.f32 %v595, %v616
        %v628 = vadd.f32 %v596, %v616
        %v629 = vadd.f32 %v597, %v621
        %v630 = vadd.f32 %v598, %v621
        %v631 = vmax.f32 %v623, 0.0
        %v632 = vmax.f32 %v624, 0.0
        %v633 = vmax.f32 %v625, 0.0
        %v634 = vmax.f32 %v626, 0.0
        %v635 = vmax.f32 %v627, 0.0
        %v636 = vmax.f32 %v628, 0.0
        %v637 = vmax.f32 %v629, 0.0
        %v638 = vmax.f32 %v630, 0.0
        %639 = vst [vmem:[%s352] sm:$0xff] %v631
        %640 = vst [vmem:[%s352 + $0x8] sm:$0xff] %v632
        %641 = vst [vmem:[%s352 + $0x10] sm:$0xff] %v633
        %642 = vst [vmem:[%s352 + $0x18] sm:$0xff] %v634
        %643 = vst [vmem:[%s352 + $0x20] sm:$0xff] %v635
        %644 = vst [vmem:[%s352 + $0x28] sm:$0xff] %v636
        %645 = vst [vmem:[%s352 + $0x30] sm:$0xff] %v637
        %646 = vst [vmem:[%s352 + $0x38] sm:$0xff] %v638
      $region52: #{_lambda_.3} parent=43 // pred_fallthru
        _
      %s647 = smul.u32 2, %s23
      %p648 = scmp.lt.s32.totalorder %s22, 1
      %s649 = scalar_select %p648, %s22, 1
      %p650 = scmp.lt.s32.totalorder %s647, 1
      %s651 = scalar_select %p650, %s647, 1
      %s652 = smul.addr %s649, 8
      %s653 = sadd.s32 %s651, %s652
      %s654 = smul.addr %s653, 8
      %s655 = scalar_lea.vmem %s6, %s654
      // Predicated region
      $region53: #{_lambda_.3} parent=43 // pred_check
        %p656 = pneg %p201
      $region54: #{_lambda_.3} parent=43 // pred_check_branch
        %658 = sbr.rel (%p656) target = $region56
      $region55: #{_lambda_.3} parent=43 // pred_region
        %s659 = smul.u32 2, %s23
      $region56: #{_lambda_.3} parent=43 // pred_fallthru
        _
    $region44: #{_lambda_.3} parent=5 // pred_fallthru
      _
    %p660 = scmp.le.s32.totalorder 2, %s12
    // Predicated region
    $region57: #{_lambda_.3} parent=5 // pred_check
      %p661 = pneg %p660
    $region58: #{_lambda_.3} parent=5 // pred_check_branch
      %663 = sbr.rel (%p661) target = $region60
    $region59: #{_lambda_.3} parent=5 // pred_region
      %s664 = ssub.s32 %s12, 2
      // Predicated region
      $region61: #{_lambda_.3} parent=59 // pred_check
        %p665 = pneg %p207
      $region62: #{_lambda_.3} parent=59 // pred_check_branch
        %667 = sbr.rel (%p665) target = $region64
      $region63: #{_lambda_.3} parent=59 // pred_region
        %s668 = smul.u32 2, %s26
        %p669 = scmp.lt.s32.totalorder %s25, 1
        %s670 = scalar_select %p669, %s25, 1
        %p671 = scmp.lt.s32.totalorder %s668, 1
        %s672 = scalar_select %p671, %s668, 1
        %s673 = smul.addr %s670, 8
        %s674 = sadd.s32 %s672, %s673
        %s675 = smul.addr %s674, 8
        %s676 = scalar_lea.vmem %s6, %s675
      $region64: #{_lambda_.3} parent=59 // pred_fallthru
        _
    $region60: #{_lambda_.3} parent=5 // pred_fallthru
      _
  $region6: #{_lambda_.3} parent=0 // loop_footer
    %s16 = sadd.s32 1, %s12
  $region7: #{_lambda_.3} parent=0 // loop_footer_branch
    %11 = sbr.rel target = $region3
  $region8: #{_lambda_.3} parent=0 // loop_exit
    _

</llo_original>
